<compile_context>
chip_gen: v7x
topology: tpu7x:2x2x1
jax: 0.10.0
libtpu: 0.0.40
codegen_flags: <defaults>
</compile_context>

<pallas_src>
import numpy as np

import jax
import jax.numpy as jnp
from jax import lax
from jax.experimental import pallas as pl
from jax.experimental.pallas import tpu as pltpu


_K = 5
_PAD = 2

# Scratch layout: interior channel-sum rows start at row 8 (sublane aligned)
# and column 128 (lane aligned); the conv padding lives in the always-zero
# cells around it and is reached by value slices at offsets 6..10 / 126..130.
_ROW0 = 8
_COL0 = 128
_HALO_BLK = 8           # height of the 8-row halo windows read from x


def _setup_srm_base_kernels() -> np.ndarray:
    """Exactly mirrors setup_srm_weights() before the cross-channel repeat."""
    k = np.array(
        [
            [[0.0, 0.0, 0.0, 0.0, 0.0],
             [0.0, 0.0, 0.0, 0.0, 0.0],
             [0.0, 1.0, -2.0, 1.0, 0.0],
             [0.0, 0.0, 0.0, 0.0, 0.0],
             [0.0, 0.0, 0.0, 0.0, 0.0]],
            [[0.0, 0.0, 0.0, 0.0, 0.0],
             [0.0, -1.0, 2.0, -1.0, 0.0],
             [0.0, 2.0, -4.0, 2.0, 0.0],
             [0.0, -1.0, 2.0, -1.0, 0.0],
             [0.0, 0.0, 0.0, 0.0, 0.0]],
            [[-1.0, 2.0, -2.0, 2.0, -1.0],
             [2.0, -6.0, 8.0, -6.0, 2.0],
             [-2.0, 8.0, -12.0, 8.0, -2.0],
             [2.0, -6.0, 8.0, -6.0, 2.0],
             [-1.0, 2.0, -2.0, 2.0, -1.0]],
        ],
        dtype=np.float32,
    )
    k[0] /= 2.0
    k[1] /= 4.0
    k[2] /= 12.0
    return k


_SRM_BASE = _setup_srm_base_kernels()          # (3, 5, 5), trace-time constants


def _make_srm_kernel(C, TH, W, H, use_halo, needs_row_mask):
    """Builds the per-(batch-block, H-tile) kernel. All args are Python consts."""
    r12 = 1.0 / 12.0

    def body(x_ref, top_ref, bot_ref, o_ref, s_sc):
        h = pl.program_id(1)
        nh = pl.num_programs(1)

        # ---- fused torch.cat([img, noise], 1): image channels pass through ----
        o_ref[:, 0:C, :, :] = x_ref[...]

        # ---- assemble the zero-padded channel sum in the VMEM scratch ----
        # Valid because the SRM weights repeat one 5x5 filter across all input
        # channels:  conv(img, repeated_k) == conv(sum_c img, k).
        s_sc[...] = jnp.zeros_like(s_sc)

        xsum = jnp.sum(x_ref[...], axis=1)                      # (BN, TH, W)
        if needs_row_mask:
            # partial last H tile: zero rows that fall outside the image
            rr = lax.broadcasted_iota(jnp.int32, (1, TH, 1), 1)
            xsum = jnp.where(rr < H - h * TH, xsum, 0.0)
        s_sc[:, _ROW0:_ROW0 + TH, _COL0:_COL0 + W] = xsum

        if use_halo:
            # 2-row halos from the neighbouring tiles (zero at image borders)
            top2 = jnp.sum(top_ref[...], axis=1)[:, _HALO_BLK - 2:_HALO_BLK, :]
            top2 = jnp.where(h > 0, top2, 0.0)
            s_sc[:, _ROW0 - 2:_ROW0, _COL0:_COL0 + W] = top2

            bot2 = jnp.sum(bot_ref[...], axis=1)[:, 0:2, :]
            rb = lax.broadcasted_iota(jnp.int32, (1, 2, 1), 1)
            ok = jnp.logical_and(h < nh - 1, (h + 1) * TH + rb < H)
            bot2 = jnp.where(ok, bot2, 0.0)
            s_sc[:, _ROW0 + TH:_ROW0 + TH + 2, _COL0:_COL0 + W] = bot2

        sfull = s_sc[...]
        rb0 = _ROW0 - _PAD
        cb0 = _COL0 - _PAD

        # ---- hoist the 5 lane-shifted slabs once per tile (5 shifts total) ----
        # s_k[..., y, x] == padded_sum[y, x + k]   for k = 0..4
        s0 = sfull[:, rb0:rb0 + TH + 4, cb0 + 0:cb0 + 0 + W]
        s1 = sfull[:, rb0:rb0 + TH + 4, cb0 + 1:cb0 + 1 + W]
        s2 = sfull[:, rb0:rb0 + TH + 4, cb0 + 2:cb0 + 2 + W]
        s3 = sfull[:, rb0:rb0 + TH + 4, cb0 + 3:cb0 + 3 + W]
        s4 = sfull[:, rb0:rb0 + TH + 4, cb0 + 4:cb0 + 4 + W]

        # ---- filters 0 & 1 are 1-D / separable and share a horizontal pass ----
        # t[y, x] = -s1 + 2*s2 - s3
        t = (s2 + s2) - (s1 + s3)                                # (BN, TH+4, W)
        t1 = t[:, 1:TH + 1, :]
        t2 = t[:, 2:TH + 2, :]
        t3 = t[:, 3:TH + 3, :]
        out0 = -0.5 * t2                                         # filter 0  (/2)
        out1 = 0.25 * ((t1 + t3) - (t2 + t2))                    # filter 1  (/4)

        # ---- filter 2 (/12): 4-fold mirror symmetry -> 9 distinct taps ----
        q0 = s0 + s4
        q1 = s1 + s3

        def fold_rows(q):
            a = q[:, 0:TH, :] + q[:, 4:TH + 4, :]
            b = q[:, 1:TH + 1, :] + q[:, 3:TH + 3, :]
            c = q[:, 2:TH + 2, :]
            return a, b, c

        a0, b0, c0 = fold_rows(q0)
        a1, b1, c1 = fold_rows(q1)
        a2, b2, c2 = fold_rows(s2)

        out2 = (a0 * (-1.0 * r12) + b0 * (2.0 * r12) + c0 * (-2.0 * r12)
                + a1 * (2.0 * r12) + b1 * (-6.0 * r12) + c1 * (8.0 * r12)
                + a2 * (-2.0 * r12) + b2 * (8.0 * r12) + c2 * (-12.0 * r12))

        o_ref[:, C + 0, :, :] = out0
        o_ref[:, C + 1, :, :] = out1
        o_ref[:, C + 2, :, :] = out2

    if use_halo:
        def kernel(x_ref, top_ref, bot_ref, o_ref, s_sc):
            body(x_ref, top_ref, bot_ref, o_ref, s_sc)
    else:
        def kernel(x_ref, o_ref, s_sc):
            body(x_ref, None, None, o_ref, s_sc)
    return kernel


def srm_wrapper_forward(x, *, tile_rows=None, batch_block=None):
    """SRMWrapper.forward: x (N, C, H, W) -> concat([x, srm_conv(x)], axis=1)."""
    N, C, H, W = x.shape
    x = x.astype(jnp.float32)

    # ---------------- tile selection (sized to a ~8 MiB VMEM budget) ----------------
    # Per-row footprint: double-buffered x & out blocks + scratch + a margin for
    # the compiler's slab-sized f32 temporaries.
    bytes_per_row = 4 * W * (2 * C + 2 * (C + 3) + 12)
    vmem_target = 8 * 1024 * 1024

    if tile_rows is not None:
        cap_rows = max(1, int(tile_rows))
    else:
        cap_rows = max(8, vmem_target // max(bytes_per_row, 1))

    if H <= cap_rows:
        TH, nh = H, 1
    else:
        TH = max(8, (min(cap_rows, H) // 8) * 8)   # halo math needs TH % 8 == 0
        nh = pl.cdiv(H, TH)
        if nh == 1:
            TH = H
    use_halo = nh > 1
    needs_row_mask = use_halo and (H % TH != 0)

    # Block several samples per grid step for small images (per-step overhead).
    if batch_block is not None:
        BN = max(1, min(N, int(batch_block)))
    elif nh == 1:
        per_sample = max(1, bytes_per_row * H)
        BN = max(1, min(N, vmem_target // per_sample))
    else:
        BN = 1

    grid = (pl.cdiv(N, BN), nh)

    x_spec = pl.BlockSpec((BN, C, TH, W), lambda nb, h: (nb, 0, h, 0))
    out_spec = pl.BlockSpec((BN, C + 3, TH, W), lambda nb, h: (nb, 0, h, 0))

    if use_halo:
        thb = TH // _HALO_BLK                     # 8-row halo blocks per H tile
        max_hb = pl.cdiv(H, _HALO_BLK) - 1

        def top_map(nb, h):
            return (nb, 0, jnp.maximum(h * thb - 1, 0), 0)

        def bot_map(nb, h):
            return (nb, 0, jnp.minimum((h + 1) * thb, max_hb), 0)

        in_specs = [x_spec,
                    pl.BlockSpec((BN, C, _HALO_BLK, W), top_map),
                    pl.BlockSpec((BN, C, _HALO_BLK, W), bot_map)]
        args = (x, x, x)
    else:
        in_specs = [x_spec]
        args = (x,)

    kernel = _make_srm_kernel(C, TH, W, H, use_halo, needs_row_mask)

    return pl.pallas_call(
        kernel,
        out_shape=jax.ShapeDtypeStruct((N, C + 3, H, W), jnp.float32),
        grid=grid,
        in_specs=in_specs,
        out_specs=out_spec,
        scratch_shapes=[
            pltpu.VMEM((BN, TH + _ROW0 + _PAD, W + _COL0 + 2 * _PAD),
                       jnp.float32),
        ],
        compiler_params=pltpu.CompilerParams(
            dimension_semantics=("parallel", "parallel"),
            vmem_limit_bytes=48 * 1024 * 1024,
        ),
    )(*args)


def _reference_forward(x):
    """Pure-XLA reference: full repeated-weight conv + concat (no factorisation)."""
    C = x.shape[1]
    xf = x.astype(jnp.float32)
    w_full = jnp.asarray(np.tile(_SRM_BASE[:, None, :, :], (1, C, 1, 1)))
    noise = lax.conv_general_dilated(
        xf, w_full,
        window_strides=(1, 1),
        padding=((_PAD, _PAD), (_PAD, _PAD)),
        dimension_numbers=("NCHW", "OIHW", "NCHW"),
        precision=lax.Precision.HIGHEST,
    )
    return jnp.concatenate([xf, noise], axis=1)


if __name__ == "__main__":
    # Primary example (module default: 3-channel image, small spatial size).
    x = jax.random.normal(jax.random.PRNGKey(0), (2, 3, 16, 16), jnp.float32)
    out = jax.block_until_ready(jax.jit(srm_wrapper_forward)(x))
    assert out.shape == (2, 6, 16, 16), out.shape
    assert bool(jnp.all(jnp.isfinite(out)))
    err = float(jnp.max(jnp.abs(out - _reference_forward(x))))
    assert err < 1e-3, f"primary mismatch vs reference conv: {err}"

    # Exercise the H-tiled (halo) path, incl. a partial last tile and C != 3.
    x2 = jax.random.normal(jax.random.PRNGKey(1), (2, 4, 40, 128), jnp.float32)
    f_tiled = jax.jit(lambda a: srm_wrapper_forward(a, tile_rows=16))
    out2 = jax.block_until_ready(f_tiled(x2))
    assert out2.shape == (2, 7, 40, 128), out2.shape
    err2 = float(jnp.max(jnp.abs(out2 - _reference_forward(x2))))
    assert err2 < 1e-3, f"tiled-path mismatch vs reference conv: {err2}"

    print("KERNEL_OK")
</pallas_src>

<mosaic_0001>
module attributes {stable_mosaic.version = 11 : i64} {
  func.func @kernel(%arg0: i32, %arg1: i32, %arg2: memref<2x3x16x16xf32, #tpu.memory_space<vmem>>, %arg3: memref<2x6x16x16xf32, #tpu.memory_space<vmem>>, %arg4: memref<2x26x148xf32, #tpu.memory_space<vmem>>) attributes {dimension_semantics = [#tpu.dimension_semantics<parallel>, #tpu.dimension_semantics<parallel>], iteration_bounds = array<i64: 1, 1>, scalar_prefetch = 0 : i64, scratch_operands = 1 : i64, tpu.core_type = #tpu.core_type<tc>, window_params = [{transform_indices = @transform_0, window_bounds = array<i64: 2, 3, 16, 16>}, {transform_indices = @transform_1, window_bounds = array<i64: 2, 6, 16, 16>}]} {
    %c0 = arith.constant 0 : index
    %c0_0 = arith.constant 0 : index
    %c0_1 = arith.constant 0 : index
    %c0_2 = arith.constant 0 : index
    %0 = vector.load %arg2[%c0, %c0_0, %c0_1, %c0_2] : memref<2x3x16x16xf32, #tpu.memory_space<vmem>>, vector<2x3x16x16xf32>
    %c0_3 = arith.constant 0 : index
    %c0_4 = arith.constant 0 : index
    %c0_5 = arith.constant 0 : index
    %c0_6 = arith.constant 0 : index
    %1 = vector.load %arg3[%c0_3, %c0_4, %c0_5, %c0_6] : memref<2x6x16x16xf32, #tpu.memory_space<vmem>>, vector<2x3x16x16xf32>
    tpu.vector_store %arg3[%c0_3, %c0_4, %c0_5, %c0_6], %0 {strides = array<i32>} : memref<2x6x16x16xf32, #tpu.memory_space<vmem>>, vector<2x3x16x16xf32>,
    %cst = arith.constant 0.000000e+00 : f32
    %2 = vector.broadcast %cst : f32 to vector<2x26x148xf32>
    %c0_7 = arith.constant 0 : index
    %c0_8 = arith.constant 0 : index
    %c0_9 = arith.constant 0 : index
    %3 = vector.load %arg4[%c0_7, %c0_8, %c0_9] : memref<2x26x148xf32, #tpu.memory_space<vmem>>, vector<2x26x148xf32>
    tpu.vector_store %arg4[%c0_7, %c0_8, %c0_9], %2 {strides = array<i32>} : memref<2x26x148xf32, #tpu.memory_space<vmem>>, vector<2x26x148xf32>,
    %c0_10 = arith.constant 0 : index
    %c0_11 = arith.constant 0 : index
    %c0_12 = arith.constant 0 : index
    %c0_13 = arith.constant 0 : index
    %4 = vector.load %arg2[%c0_10, %c0_11, %c0_12, %c0_13] : memref<2x3x16x16xf32, #tpu.memory_space<vmem>>, vector<2x3x16x16xf32>
    %cst_14 = arith.constant dense<0.000000e+00> : vector<2x16x16xf32>
    %5 = vector.multi_reduction <add>, %4, %cst_14 [1] : vector<2x3x16x16xf32> to vector<2x16x16xf32>
    %c0_15 = arith.constant 0 : index
    %c8 = arith.constant 8 : index
    %c128 = arith.constant 128 : index
    %6 = vector.load %arg4[%c0_15, %c8, %c128] : memref<2x26x148xf32, #tpu.memory_space<vmem>>, vector<2x16x16xf32>
    tpu.vector_store %arg4[%c0_15, %c8, %c128], %5 {strides = array<i32>} : memref<2x26x148xf32, #tpu.memory_space<vmem>>, vector<2x16x16xf32>,
    %c0_16 = arith.constant 0 : index
    %c0_17 = arith.constant 0 : index
    %c0_18 = arith.constant 0 : index
    %7 = vector.load %arg4[%c0_16, %c0_17, %c0_18] : memref<2x26x148xf32, #tpu.memory_space<vmem>>, vector<2x26x148xf32>
    %8 = vector.extract_strided_slice %7 {offsets = [0, 6, 126], sizes = [2, 20, 16], strides = [1, 1, 1]} : vector<2x26x148xf32> to vector<2x20x16xf32>
    %9 = vector.extract_strided_slice %7 {offsets = [0, 6, 127], sizes = [2, 20, 16], strides = [1, 1, 1]} : vector<2x26x148xf32> to vector<2x20x16xf32>
    %10 = vector.extract_strided_slice %7 {offsets = [0, 6, 128], sizes = [2, 20, 16], strides = [1, 1, 1]} : vector<2x26x148xf32> to vector<2x20x16xf32>
    %11 = vector.extract_strided_slice %7 {offsets = [0, 6, 129], sizes = [2, 20, 16], strides = [1, 1, 1]} : vector<2x26x148xf32> to vector<2x20x16xf32>
    %12 = vector.extract_strided_slice %7 {offsets = [0, 6, 130], sizes = [2, 20, 16], strides = [1, 1, 1]} : vector<2x26x148xf32> to vector<2x20x16xf32>
    %13 = arith.addf %10, %10 : vector<2x20x16xf32>
    %14 = arith.addf %9, %11 : vector<2x20x16xf32>
    %15 = arith.subf %13, %14 : vector<2x20x16xf32>
    %16 = vector.extract_strided_slice %15 {offsets = [0, 1, 0], sizes = [2, 16, 16], strides = [1, 1, 1]} : vector<2x20x16xf32> to vector<2x16x16xf32>
    %17 = vector.extract_strided_slice %15 {offsets = [0, 2, 0], sizes = [2, 16, 16], strides = [1, 1, 1]} : vector<2x20x16xf32> to vector<2x16x16xf32>
    %18 = vector.extract_strided_slice %15 {offsets = [0, 3, 0], sizes = [2, 16, 16], strides = [1, 1, 1]} : vector<2x20x16xf32> to vector<2x16x16xf32>
    %cst_19 = arith.constant -5.000000e-01 : f32
    %19 = vector.broadcast %cst_19 : f32 to vector<2x16x16xf32>
    %20 = arith.mulf %19, %17 : vector<2x16x16xf32>
    %21 = arith.addf %16, %18 : vector<2x16x16xf32>
    %22 = arith.addf %17, %17 : vector<2x16x16xf32>
    %23 = arith.subf %21, %22 : vector<2x16x16xf32>
    %cst_20 = arith.constant 2.500000e-01 : f32
    %24 = vector.broadcast %cst_20 : f32 to vector<2x16x16xf32>
    %25 = arith.mulf %24, %23 : vector<2x16x16xf32>
    %26 = arith.addf %8, %12 : vector<2x20x16xf32>
    %27 = arith.addf %9, %11 : vector<2x20x16xf32>
    %28 = vector.extract_strided_slice %26 {offsets = [0, 0, 0], sizes = [2, 16, 16], strides = [1, 1, 1]} : vector<2x20x16xf32> to vector<2x16x16xf32>
    %29 = vector.extract_strided_slice %26 {offsets = [0, 4, 0], sizes = [2, 16, 16], strides = [1, 1, 1]} : vector<2x20x16xf32> to vector<2x16x16xf32>
    %30 = arith.addf %28, %29 : vector<2x16x16xf32>
    %31 = vector.extract_strided_slice %26 {offsets = [0, 1, 0], sizes = [2, 16, 16], strides = [1, 1, 1]} : vector<2x20x16xf32> to vector<2x16x16xf32>
    %32 = vector.extract_strided_slice %26 {offsets = [0, 3, 0], sizes = [2, 16, 16], strides = [1, 1, 1]} : vector<2x20x16xf32> to vector<2x16x16xf32>
    %33 = arith.addf %31, %32 : vector<2x16x16xf32>
    %34 = vector.extract_strided_slice %26 {offsets = [0, 2, 0], sizes = [2, 16, 16], strides = [1, 1, 1]} : vector<2x20x16xf32> to vector<2x16x16xf32>
    %35 = vector.extract_strided_slice %27 {offsets = [0, 0, 0], sizes = [2, 16, 16], strides = [1, 1, 1]} : vector<2x20x16xf32> to vector<2x16x16xf32>
    %36 = vector.extract_strided_slice %27 {offsets = [0, 4, 0], sizes = [2, 16, 16], strides = [1, 1, 1]} : vector<2x20x16xf32> to vector<2x16x16xf32>
    %37 = arith.addf %35, %36 : vector<2x16x16xf32>
    %38 = vector.extract_strided_slice %27 {offsets = [0, 1, 0], sizes = [2, 16, 16], strides = [1, 1, 1]} : vector<2x20x16xf32> to vector<2x16x16xf32>
    %39 = vector.extract_strided_slice %27 {offsets = [0, 3, 0], sizes = [2, 16, 16], strides = [1, 1, 1]} : vector<2x20x16xf32> to vector<2x16x16xf32>
    %40 = arith.addf %38, %39 : vector<2x16x16xf32>
    %41 = vector.extract_strided_slice %27 {offsets = [0, 2, 0], sizes = [2, 16, 16], strides = [1, 1, 1]} : vector<2x20x16xf32> to vector<2x16x16xf32>
    %42 = vector.extract_strided_slice %10 {offsets = [0, 0, 0], sizes = [2, 16, 16], strides = [1, 1, 1]} : vector<2x20x16xf32> to vector<2x16x16xf32>
    %43 = vector.extract_strided_slice %10 {offsets = [0, 4, 0], sizes = [2, 16, 16], strides = [1, 1, 1]} : vector<2x20x16xf32> to vector<2x16x16xf32>
    %44 = arith.addf %42, %43 : vector<2x16x16xf32>
    %45 = vector.extract_strided_slice %10 {offsets = [0, 1, 0], sizes = [2, 16, 16], strides = [1, 1, 1]} : vector<2x20x16xf32> to vector<2x16x16xf32>
    %46 = vector.extract_strided_slice %10 {offsets = [0, 3, 0], sizes = [2, 16, 16], strides = [1, 1, 1]} : vector<2x20x16xf32> to vector<2x16x16xf32>
    %47 = arith.addf %45, %46 : vector<2x16x16xf32>
    %48 = vector.extract_strided_slice %10 {offsets = [0, 2, 0], sizes = [2, 16, 16], strides = [1, 1, 1]} : vector<2x20x16xf32> to vector<2x16x16xf32>
    %cst_21 = arith.constant -0.0833333358 : f32
    %49 = vector.broadcast %cst_21 : f32 to vector<2x16x16xf32>
    %50 = arith.mulf %30, %49 : vector<2x16x16xf32>
    %cst_22 = arith.constant 0.166666672 : f32
    %51 = vector.broadcast %cst_22 : f32 to vector<2x16x16xf32>
    %52 = arith.mulf %33, %51 : vector<2x16x16xf32>
    %53 = arith.addf %50, %52 : vector<2x16x16xf32>
    %cst_23 = arith.constant -0.166666672 : f32
    %54 = vector.broadcast %cst_23 : f32 to vector<2x16x16xf32>
    %55 = arith.mulf %34, %54 : vector<2x16x16xf32>
    %56 = arith.addf %53, %55 : vector<2x16x16xf32>
    %cst_24 = arith.constant 0.166666672 : f32
    %57 = vector.broadcast %cst_24 : f32 to vector<2x16x16xf32>
    %58 = arith.mulf %37, %57 : vector<2x16x16xf32>
    %59 = arith.addf %56, %58 : vector<2x16x16xf32>
    %cst_25 = arith.constant -5.000000e-01 : f32
    %60 = vector.broadcast %cst_25 : f32 to vector<2x16x16xf32>
    %61 = arith.mulf %40, %60 : vector<2x16x16xf32>
    %62 = arith.addf %59, %61 : vector<2x16x16xf32>
    %cst_26 = arith.constant 0.666666686 : f32
    %63 = vector.broadcast %cst_26 : f32 to vector<2x16x16xf32>
    %64 = arith.mulf %41, %63 : vector<2x16x16xf32>
    %65 = arith.addf %62, %64 : vector<2x16x16xf32>
    %cst_27 = arith.constant -0.166666672 : f32
    %66 = vector.broadcast %cst_27 : f32 to vector<2x16x16xf32>
    %67 = arith.mulf %44, %66 : vector<2x16x16xf32>
    %68 = arith.addf %65, %67 : vector<2x16x16xf32>
    %cst_28 = arith.constant 0.666666686 : f32
    %69 = vector.broadcast %cst_28 : f32 to vector<2x16x16xf32>
    %70 = arith.mulf %47, %69 : vector<2x16x16xf32>
    %71 = arith.addf %68, %70 : vector<2x16x16xf32>
    %cst_29 = arith.constant -1.000000e+00 : f32
    %72 = vector.broadcast %cst_29 : f32 to vector<2x16x16xf32>
    %73 = arith.mulf %48, %72 : vector<2x16x16xf32>
    %74 = arith.addf %71, %73 : vector<2x16x16xf32>
    %c0_30 = arith.constant 0 : index
    %c3 = arith.constant 3 : index
    %c0_31 = arith.constant 0 : index
    %c0_32 = arith.constant 0 : index
    %75 = vector.load %arg3[%c0_30, %c3, %c0_31, %c0_32] : memref<2x6x16x16xf32, #tpu.memory_space<vmem>>, vector<2x1x16x16xf32>
    %76 = vector.shape_cast %75 : vector<2x1x16x16xf32> to vector<2x16x16xf32>
    %77 = vector.shape_cast %20 : vector<2x16x16xf32> to vector<2x1x16x16xf32>
    tpu.vector_store %arg3[%c0_30, %c3, %c0_31, %c0_32], %77 {strides = array<i32>} : memref<2x6x16x16xf32, #tpu.memory_space<vmem>>, vector<2x1x16x16xf32>,
    %c0_33 = arith.constant 0 : index
    %c4 = arith.constant 4 : index
    %c0_34 = arith.constant 0 : index
    %c0_35 = arith.constant 0 : index
    %78 = vector.load %arg3[%c0_33, %c4, %c0_34, %c0_35] : memref<2x6x16x16xf32, #tpu.memory_space<vmem>>, vector<2x1x16x16xf32>
    %79 = vector.shape_cast %78 : vector<2x1x16x16xf32> to vector<2x16x16xf32>
    %80 = vector.shape_cast %25 : vector<2x16x16xf32> to vector<2x1x16x16xf32>
    tpu.vector_store %arg3[%c0_33, %c4, %c0_34, %c0_35], %80 {strides = array<i32>} : memref<2x6x16x16xf32, #tpu.memory_space<vmem>>, vector<2x1x16x16xf32>,
    %c0_36 = arith.constant 0 : index
    %c5 = arith.constant 5 : index
    %c0_37 = arith.constant 0 : index
    %c0_38 = arith.constant 0 : index
    %81 = vector.load %arg3[%c0_36, %c5, %c0_37, %c0_38] : memref<2x6x16x16xf32, #tpu.memory_space<vmem>>, vector<2x1x16x16xf32>
    %82 = vector.shape_cast %81 : vector<2x1x16x16xf32> to vector<2x16x16xf32>
    %83 = vector.shape_cast %74 : vector<2x16x16xf32> to vector<2x1x16x16xf32>
    tpu.vector_store %arg3[%c0_36, %c5, %c0_37, %c0_38], %83 {strides = array<i32>} : memref<2x6x16x16xf32, #tpu.memory_space<vmem>>, vector<2x1x16x16xf32>,
    return
  }
  func.func @transform_0(%arg0: i32, %arg1: i32) -> (i32, i32, i32, i32) {
    %c0_i32 = arith.constant 0 : i32
    %c0_i32_0 = arith.constant 0 : i32
    %c0_i32_1 = arith.constant 0 : i32
    return %arg0, %c0_i32, %arg1, %c0_i32_0 : i32, i32, i32, i32
  }
  func.func @transform_1(%arg0: i32, %arg1: i32) -> (i32, i32, i32, i32) {
    %c0_i32 = arith.constant 0 : i32
    %c0_i32_0 = arith.constant 0 : i32
    %c0_i32_1 = arith.constant 0 : i32
    return %arg0, %c0_i32, %arg1, %c0_i32_0 : i32, i32, i32, i32
  }
}

</mosaic_0001>

<llo_original>
// kernel: srm_wrapper_forward.1
$region0: #{srm_wrapper_forward.1}
  #allocation0 [shape = 'u32[]', space=smem, size = 0x4, offset = 0x4, fixed_abs, tag = 'smem constant byte address 0x4 - core index']
  #allocation1 [shape = 'u32[144,128]{1,0:T(1,128)}', space=vmem, size = 0x12000, scoped, tag = 'internal scratch']
  #allocation2 [shape = 'f32[2,26,148]{2,1,0:T(8,128)}', space=vmem, size = 0x10000, scoped, tag = 'scratch operand']
  %s0 = inlined_call_operand.hbm [shape: f32[2,3,16,16], index: 0, kind: input, shape index: {}]
  %s1 = inlined_call_operand.hbm [shape: f32[2,6,16,16], index: 1, kind: output, shape index: {}]
  %s2 = sld [smem:[#allocation0]]
  $region18: #{srm_wrapper_forward.1} parent=0
    _
  %s4 = ssub.s32 1, %s2
  %s5 = scalar_select 0, %s4, %s2
  $region1: #{srm_wrapper_forward.1} parent=0
    #allocation3 [shape = 'u8[49152]{0}', space=vmem, size = 0xc000, scoped, tag = 'input window, operand 0, single buffered']
    #allocation4 [shape = 's32[1]{0}', space=sflag, size = 0x4, scoped, tag = 'scoped memory for srm_wrapper_forward.1']
    #allocation5 [shape = 's32[1]{0}', space=sflag, size = 0x4, scoped, tag = 'scoped memory for srm_wrapper_forward.1']
    #allocation6 [shape = 'u8[98304]{0}', space=vmem, size = 0x18000, scoped, tag = 'output window, operand 0, single buffered']
    %6 = vsyncpa [#allocation4], 0
    %7 = vsyncpa [#allocation5], 0
    // Predicated region
    $region2: #{srm_wrapper_forward.1} parent=1 // pred_check
      _
    $region3: #{srm_wrapper_forward.1} parent=1 // pred_check_branch
      %9 = sbr.rel (0) target = $region5
    $region4: #{srm_wrapper_forward.1} parent=1 // pred_region
      %s11 = ssub.s32 1536, 1536
      %12 = vsyncadd [#allocation4], %s11
      %s13 = sshll.u32 [#allocation3], 4
      %s14 = int_to_ptr.vmem [resolvable:$true] %s13
      %19 = dma.hbm_to_vmem [thread:$0]  %s0, 1536, %s14, [#allocation4], 128, 128, 8
    $region5: #{srm_wrapper_forward.1} parent=1 // pred_fallthru
      _
    // Predicated region
    $region6: #{srm_wrapper_forward.1} parent=1 // pred_check
      _
    $region7: #{srm_wrapper_forward.1} parent=1 // pred_check_branch
      %21 = sbr.rel (0) target = $region9
    $region8: #{srm_wrapper_forward.1} parent=1 // pred_region
      %22 = dma.done [#allocation4], 1536
    $region9: #{srm_wrapper_forward.1} parent=1 // pred_fallthru
      _
    %v23 = vld [vmem:[#allocation3] sm:$0xff]
    %v24 = vld [vmem:[#allocation3 + $0x8] sm:$0xff]
    %v25 = vld [vmem:[#allocation3 + $0x10] sm:$0xff]
    %v26 = vld [vmem:[#allocation3 + $0x18] sm:$0xff]
    %v27 = vld [vmem:[#allocation3 + $0x20] sm:$0xff]
    %v28 = vld [vmem:[#allocation3 + $0x28] sm:$0xff]
    %v29 = vld [vmem:[#allocation3 + $0x30] sm:$0xff]
    %v30 = vld [vmem:[#allocation3 + $0x38] sm:$0xff]
    %v31 = vld [vmem:[#allocation3 + $0x40] sm:$0xff]
    %v32 = vld [vmem:[#allocation3 + $0x48] sm:$0xff]
    %v33 = vld [vmem:[#allocation3 + $0x50] sm:$0xff]
    %v34 = vld [vmem:[#allocation3 + $0x58] sm:$0xff]
    %vm35 = vcmask 130048
    %36 = vst.msk [vmem:[#allocation6] sm:$0xff] %vm35, %v23
    %37 = vst.msk [vmem:[#allocation6 + $0x8] sm:$0xff] %vm35, %v24
    %38 = vst.msk [vmem:[#allocation6 + $0x10] sm:$0xff] %vm35, %v25
    %39 = vst.msk [vmem:[#allocation6 + $0x18] sm:$0xff] %vm35, %v26
    %40 = vst.msk [vmem:[#allocation6 + $0x20] sm:$0xff] %vm35, %v27
    %41 = vst.msk [vmem:[#allocation6 + $0x28] sm:$0xff] %vm35, %v28
    %42 = vst.msk [vmem:[#allocation6 + $0x60] sm:$0xff] %vm35, %v29
    %43 = vst.msk [vmem:[#allocation6 + $0x68] sm:$0xff] %vm35, %v30
    %44 = vst.msk [vmem:[#allocation6 + $0x70] sm:$0xff] %vm35, %v31
    %45 = vst.msk [vmem:[#allocation6 + $0x78] sm:$0xff] %vm35, %v32
    %46 = vst.msk [vmem:[#allocation6 + $0x80] sm:$0xff] %vm35, %v33
    %47 = vst.msk [vmem:[#allocation6 + $0x88] sm:$0xff] %vm35, %v34
    %48 = vst [vmem:[#allocation2] sm:$0xff] 0.0
    %vm49 = vcmask 162816
    %50 = vst.msk [vmem:[#allocation2 + $0x8] sm:$0xff] %vm49, 0.0
    %51 = vst [vmem:[#allocation2 + $0x10] sm:$0xff] 0.0
    %52 = vst.msk [vmem:[#allocation2 + $0x18] sm:$0xff] %vm49, 0.0
    %53 = vst [vmem:[#allocation2 + $0x20] sm:$0xff] 0.0
    %54 = vst.msk [vmem:[#allocation2 + $0x28] sm:$0xff] %vm49, 0.0
    %55 = vst [vmem:[#allocation2 + $0x30] sm:$0x3] 0.0
    %vm56 = vcmask 156672
    %57 = vst.msk [vmem:[#allocation2 + $0x38] sm:$0x3] %vm56, 0.0
    %58 = vst [vmem:[#allocation2 + $0x40] sm:$0xff] 0.0
    %59 = vst.msk [vmem:[#allocation2 + $0x48] sm:$0xff] %vm49, 0.0
    %60 = vst [vmem:[#allocation2 + $0x50] sm:$0xff] 0.0
    %61 = vst.msk [vmem:[#allocation2 + $0x58] sm:$0xff] %vm49, 0.0
    %62 = vst [vmem:[#allocation2 + $0x60] sm:$0xff] 0.0
    %63 = vst.msk [vmem:[#allocation2 + $0x68] sm:$0xff] %vm49, 0.0
    %64 = vst [vmem:[#allocation2 + $0x70] sm:$0x3] 0.0
    %65 = vst.msk [vmem:[#allocation2 + $0x78] sm:$0x3] %vm56, 0.0
    %v66 = vld [vmem:[#allocation3] sm:$0xff]
    %v67 = vld [vmem:[#allocation3 + $0x8] sm:$0xff]
    %v68 = vld [vmem:[#allocation3 + $0x10] sm:$0xff]
    %v69 = vld [vmem:[#allocation3 + $0x18] sm:$0xff]
    %v70 = vld [vmem:[#allocation3 + $0x20] sm:$0xff]
    %v71 = vld [vmem:[#allocation3 + $0x28] sm:$0xff]
    %v72 = vld [vmem:[#allocation3 + $0x30] sm:$0xff]
    %v73 = vld [vmem:[#allocation3 + $0x38] sm:$0xff]
    %v74 = vld [vmem:[#allocation3 + $0x40] sm:$0xff]
    %v75 = vld [vmem:[#allocation3 + $0x48] sm:$0xff]
    %v76 = vld [vmem:[#allocation3 + $0x50] sm:$0xff]
    %v77 = vld [vmem:[#allocation3 + $0x58] sm:$0xff]
    %v78 = vsel %vm35, %v66, 0.0
    %v79 = vsel %vm35, %v68, 0.0
    %v80 = vadd.f32 %v78, %v79
    %v81 = vsel %vm35, %v70, 0.0
    %v82 = vadd.f32 %v80, %v81
    %v83 = vsel %vm35, %v67, 0.0
    %v84 = vsel %vm35, %v69, 0.0
    %v85 = vadd.f32 %v83, %v84
    %v86 = vsel %vm35, %v71, 0.0
    %v87 = vadd.f32 %v85, %v86
    %v88 = vsel %vm35, %v72, 0.0
    %v89 = vsel %vm35, %v74, 0.0
    %v90 = vadd.f32 %v88, %v89
    %v91 = vsel %vm35, %v76, 0.0
    %v92 = vadd.f32 %v90, %v91
    %v93 = vsel %vm35, %v73, 0.0
    %v94 = vsel %vm35, %v75, 0.0
    %v95 = vadd.f32 %v93, %v94
    %v96 = vsel %vm35, %v77, 0.0
    %v97 = vadd.f32 %v95, %v96
    %98 = vst.msk [vmem:[#allocation2 + $0x18] sm:$0xff] %vm35, %v82
    %99 = vst.msk [vmem:[#allocation2 + $0x28] sm:$0xff] %vm35, %v87
    %100 = vst.msk [vmem:[#allocation2 + $0x58] sm:$0xff] %vm35, %v92
    %101 = vst.msk [vmem:[#allocation2 + $0x68] sm:$0xff] %vm35, %v97
    %v102 = vld [vmem:[#allocation2] sm:$0xff]
    %v103 = vld [vmem:[#allocation2 + $0x8] sm:$0xff]
    %v104 = vld [vmem:[#allocation2 + $0x10] sm:$0xff]
    %v105 = vld [vmem:[#allocation2 + $0x18] sm:$0xff]
    %v106 = vld [vmem:[#allocation2 + $0x20] sm:$0xff]
    %v107 = vld [vmem:[#allocation2 + $0x28] sm:$0xff]
    %v108 = vld [vmem:[#allocation2 + $0x30] sm:$0x3]
    %v109 = vld [vmem:[#allocation2 + $0x38] sm:$0x3]
    %v110 = vld [vmem:[#allocation2 + $0x40] sm:$0xff]
    %v111 = vld [vmem:[#allocation2 + $0x48] sm:$0xff]
    %v112 = vld [vmem:[#allocation2 + $0x50] sm:$0xff]
    %v113 = vld [vmem:[#allocation2 + $0x58] sm:$0xff]
    %v114 = vld [vmem:[#allocation2 + $0x60] sm:$0xff]
    %v115 = vld [vmem:[#allocation2 + $0x68] sm:$0xff]
    %v116 = vld [vmem:[#allocation2 + $0x70] sm:$0x3]
    %v117 = vld [vmem:[#allocation2 + $0x78] sm:$0x3]
    %v118 = vadd.f32 %v103, %v103
    %v119 = vadd.f32 %v105, %v105
    %v120 = vadd.f32 %v107, %v107
    %v121 = vadd.f32 %v109, %v109
    %v122 = vadd.f32 %v111, %v111
    %v123 = vadd.f32 %v113, %v113
    %v124 = vadd.f32 %v115, %v115
    %v125 = vadd.f32 %v117, %v117
    %134 = vrot.lane.b32.xlu0 %v103, 126
    %v135 = vpop.permute.xlu0 %134
    %136 = vrot.lane.b32.xlu0 %v105, 126
    %v137 = vpop.permute.xlu0 %136
    %138 = vrot.lane.b32.xlu0 %v107, 126
    %v139 = vpop.permute.xlu0 %138
    %140 = vrot.lane.b32.xlu0 %v109, 126
    %v141 = vpop.permute.xlu0 %140
    %142 = vrot.lane.b32.xlu0 %v111, 126
    %v143 = vpop.permute.xlu0 %142
    %144 = vrot.lane.b32.xlu0 %v113, 126
    %v145 = vpop.permute.xlu0 %144
    %146 = vrot.lane.b32.xlu0 %v115, 126
    %v147 = vpop.permute.xlu0 %146
    %148 = vrot.lane.b32.xlu0 %v117, 126
    %v149 = vpop.permute.xlu0 %148
    %v158 = vadd.f32 %v102, %v135
    %v159 = vadd.f32 %v103, %v135
    %v160 = vadd.f32 %v104, %v137
    %v161 = vadd.f32 %v105, %v137
    %v162 = vadd.f32 %v106, %v139
    %v163 = vadd.f32 %v107, %v139
    %v164 = vadd.f32 %v108, %v141
    %v165 = vadd.f32 %v109, %v141
    %v166 = vadd.f32 %v110, %v143
    %v167 = vadd.f32 %v111, %v143
    %v168 = vadd.f32 %v112, %v145
    %v169 = vadd.f32 %v113, %v145
    %v170 = vadd.f32 %v114, %v147
    %v171 = vadd.f32 %v115, %v147
    %v172 = vadd.f32 %v116, %v149
    %v173 = vadd.f32 %v117, %v149
    %190 = vrot.lane.b32.xlu0 %v158, 1
    %v191 = vpop.permute.xlu0 %190
    %192 = vrot.lane.b32.xlu0 %v159, 1
    %v193 = vpop.permute.xlu0 %192
    %194 = vrot.lane.b32.xlu0 %v160, 1
    %v195 = vpop.permute.xlu0 %194
    %196 = vrot.lane.b32.xlu0 %v161, 1
    %v197 = vpop.permute.xlu0 %196
    %198 = vrot.lane.b32.xlu0 %v162, 1
    %v199 = vpop.permute.xlu0 %198
    %200 = vrot.lane.b32.xlu0 %v163, 1
    %v201 = vpop.permute.xlu0 %200
    %202 = vrot.lane.b32.xlu0 %v164, 1
    %v203 = vpop.permute.xlu0 %202
    %204 = vrot.lane.b32.xlu0 %v165, 1
    %v205 = vpop.permute.xlu0 %204
    %206 = vrot.lane.b32.xlu0 %v166, 1
    %v207 = vpop.permute.xlu0 %206
    %208 = vrot.lane.b32.xlu0 %v167, 1
    %v209 = vpop.permute.xlu0 %208
    %210 = vrot.lane.b32.xlu0 %v168, 1
    %v211 = vpop.permute.xlu0 %210
    %212 = vrot.lane.b32.xlu0 %v169, 1
    %v213 = vpop.permute.xlu0 %212
    %214 = vrot.lane.b32.xlu0 %v170, 1
    %v215 = vpop.permute.xlu0 %214
    %216 = vrot.lane.b32.xlu0 %v171, 1
    %v217 = vpop.permute.xlu0 %216
    %218 = vrot.lane.b32.xlu0 %v172, 1
    %v219 = vpop.permute.xlu0 %218
    %220 = vrot.lane.b32.xlu0 %v173, 1
    %v221 = vpop.permute.xlu0 %220
    %vm222 = vcmask 7168
    %v223 = vsel %vm222, %v191, %v193
    %v224 = vsel %vm222, %v195, %v197
    %v225 = vsel %vm222, %v199, %v201
    %v226 = vsel %vm222, %v203, %v205
    %v227 = vsel %vm222, %v207, %v209
    %v228 = vsel %vm222, %v211, %v213
    %v229 = vsel %vm222, %v215, %v217
    %v230 = vsel %vm222, %v219, %v221
    %v239 = vsub.f32 %v118, %v223
    %v240 = vsub.f32 %v119, %v224
    %v241 = vsub.f32 %v120, %v225
    %v242 = vsub.f32 %v121, %v226
    %v243 = vsub.f32 %v122, %v227
    %v244 = vsub.f32 %v123, %v228
    %v245 = vsub.f32 %v124, %v229
    %v246 = vsub.f32 %v125, %v230
    %v247 = vmul.f32 %v240, -0.5
    %v248 = vmul.f32 %v241, -0.5
    %v249 = vmul.f32 %v244, -0.5
    %v250 = vmul.f32 %v245, -0.5
    %vm257 = vcmask 1045504
    %v258 = vrot.slane %v240, 2
    %v259 = vrot.slane %v241, 2
    %v260 = vsel %vm257, %v258, %v259
    %v261 = vrot.slane %v242, 2
    %v262 = vsel %vm257, %v259, %v261
    %v263 = vrot.slane %v244, 2
    %v264 = vrot.slane %v245, 2
    %v265 = vsel %vm257, %v263, %v264
    %v266 = vrot.slane %v246, 2
    %v267 = vsel %vm257, %v264, %v266
    %v274 = vadd.f32 %v239, %v258
    %v275 = vadd.f32 %v240, %v260
    %v276 = vadd.f32 %v241, %v262
    %v277 = vadd.f32 %v243, %v263
    %v278 = vadd.f32 %v244, %v265
    %v279 = vadd.f32 %v245, %v267
    %v280 = vadd.f32 %v240, %v240
    %v281 = vadd.f32 %v241, %v241
    %v282 = vadd.f32 %v244, %v244
    %v283 = vadd.f32 %v245, %v245
    %vm288 = vcmask 1046528
    %v289 = vrot.slane %v280, 1
    %v290 = vrot.slane %v281, 1
    %v291 = vsel %vm288, %v289, %v290
    %v292 = vrot.slane %v282, 1
    %v293 = vrot.slane %v283, 1
    %v294 = vsel %vm288, %v292, %v293
    %v301 = vsub.f32 %v274, %v289
    %v302 = vsub.f32 %v275, %v291
    %v303 = vsub.f32 %v276, %v290
    %v304 = vsub.f32 %v277, %v292
    %v305 = vsub.f32 %v278, %v294
    %v306 = vsub.f32 %v279, %v293
    %v307 = vmul.f32 %v301, 0.25
    %v308 = vmul.f32 %v302, 0.25
    %v309 = vmul.f32 %v303, 0.25
    %v310 = vmul.f32 %v304, 0.25
    %v311 = vmul.f32 %v305, 0.25
    %v312 = vmul.f32 %v306, 0.25
    %313 = vrot.lane.b32.xlu0 %v103, 124
    %v314 = vpop.permute.xlu0 %313
    %315 = vrot.lane.b32.xlu0 %v105, 124
    %v316 = vpop.permute.xlu0 %315
    %317 = vrot.lane.b32.xlu0 %v107, 124
    %v318 = vpop.permute.xlu0 %317
    %319 = vrot.lane.b32.xlu0 %v109, 124
    %v320 = vpop.permute.xlu0 %319
    %321 = vrot.lane.b32.xlu0 %v111, 124
    %v322 = vpop.permute.xlu0 %321
    %323 = vrot.lane.b32.xlu0 %v113, 124
    %v324 = vpop.permute.xlu0 %323
    %325 = vrot.lane.b32.xlu0 %v115, 124
    %v326 = vpop.permute.xlu0 %325
    %327 = vrot.lane.b32.xlu0 %v117, 124
    %v328 = vpop.permute.xlu0 %327
    %v337 = vadd.f32 %v102, %v314
    %v338 = vadd.f32 %v103, %v314
    %v339 = vadd.f32 %v104, %v316
    %v340 = vadd.f32 %v105, %v316
    %v341 = vadd.f32 %v106, %v318
    %v342 = vadd.f32 %v107, %v318
    %v343 = vadd.f32 %v108, %v320
    %v344 = vadd.f32 %v109, %v320
    %v345 = vadd.f32 %v110, %v322
    %v346 = vadd.f32 %v111, %v322
    %v347 = vadd.f32 %v112, %v324
    %v348 = vadd.f32 %v113, %v324
    %v349 = vadd.f32 %v114, %v326
    %v350 = vadd.f32 %v115, %v326
    %v351 = vadd.f32 %v116, %v328
    %v352 = vadd.f32 %v117, %v328
    %vm365 = vcmask 1043456
    %v366 = vrot.slane %v339, 4
    %v367 = vrot.slane %v340, 4
    %v368 = vrot.slane %v341, 4
    %v369 = vsel %vm365, %v366, %v368
    %v370 = vrot.slane %v342, 4
    %v371 = vsel %vm365, %v367, %v370
    %v372 = vrot.slane %v343, 4
    %v373 = vsel %vm365, %v368, %v372
    %v374 = vrot.slane %v344, 4
    %v375 = vsel %vm365, %v370, %v374
    %v376 = vrot.slane %v347, 4
    %v377 = vrot.slane %v348, 4
    %v378 = vrot.slane %v349, 4
    %v379 = vsel %vm365, %v376, %v378
    %v380 = vrot.slane %v350, 4
    %v381 = vsel %vm365, %v377, %v380
    %v382 = vrot.slane %v351, 4
    %v383 = vsel %vm365, %v378, %v382
    %v384 = vrot.slane %v352, 4
    %v385 = vsel %vm365, %v380, %v384
    %v398 = vadd.f32 %v337, %v366
    %v399 = vadd.f32 %v338, %v367
    %v400 = vadd.f32 %v339, %v369
    %v401 = vadd.f32 %v340, %v371
    %v402 = vadd.f32 %v341, %v373
    %v403 = vadd.f32 %v342, %v375
    %v404 = vadd.f32 %v345, %v376
    %v405 = vadd.f32 %v346, %v377
    %v406 = vadd.f32 %v347, %v379
    %v407 = vadd.f32 %v348, %v381
    %v408 = vadd.f32 %v349, %v383
    %v409 = vadd.f32 %v350, %v385
    %v410 = vrot.slane %v339, 2
    %v411 = vrot.slane %v340, 2
    %v412 = vrot.slane %v341, 2
    %v413 = vsel %vm257, %v410, %v412
    %v414 = vrot.slane %v342, 2
    %v415 = vsel %vm257, %v411, %v414
    %v416 = vrot.slane %v343, 2
    %v417 = vsel %vm257, %v412, %v416
    %v418 = vrot.slane %v344, 2
    %v419 = vsel %vm257, %v414, %v418
    %v420 = vrot.slane %v347, 2
    %v421 = vrot.slane %v348, 2
    %v422 = vrot.slane %v349, 2
    %v423 = vsel %vm257, %v420, %v422
    %v424 = vrot.slane %v350, 2
    %v425 = vsel %vm257, %v421, %v424
    %v426 = vrot.slane %v351, 2
    %v427 = vsel %vm257, %v422, %v426
    %v428 = vrot.slane %v352, 2
    %v429 = vsel %vm257, %v424, %v428
    %v442 = vadd.f32 %v337, %v410
    %v443 = vadd.f32 %v338, %v411
    %v444 = vadd.f32 %v339, %v413
    %v445 = vadd.f32 %v340, %v415
    %v446 = vadd.f32 %v341, %v417
    %v447 = vadd.f32 %v342, %v419
    %v448 = vadd.f32 %v345, %v420
    %v449 = vadd.f32 %v346, %v421
    %v450 = vadd.f32 %v347, %v423
    %v451 = vadd.f32 %v348, %v425
    %v452 = vadd.f32 %v349, %v427
    %v453 = vadd.f32 %v350, %v429
    %v454 = vrot.slane %v160, 4
    %v455 = vrot.slane %v161, 4
    %v456 = vrot.slane %v162, 4
    %v457 = vsel %vm365, %v454, %v456
    %v458 = vrot.slane %v163, 4
    %v459 = vsel %vm365, %v455, %v458
    %v460 = vrot.slane %v164, 4
    %v461 = vsel %vm365, %v456, %v460
    %v462 = vrot.slane %v165, 4
    %v463 = vsel %vm365, %v458, %v462
    %v464 = vrot.slane %v168, 4
    %v465 = vrot.slane %v169, 4
    %v466 = vrot.slane %v170, 4
    %v467 = vsel %vm365, %v464, %v466
    %v468 = vrot.slane %v171, 4
    %v469 = vsel %vm365, %v465, %v468
    %v470 = vrot.slane %v172, 4
    %v471 = vsel %vm365, %v466, %v470
    %v472 = vrot.slane %v173, 4
    %v473 = vsel %vm365, %v468, %v472
    %v486 = vadd.f32 %v158, %v454
    %v487 = vadd.f32 %v159, %v455
    %v488 = vadd.f32 %v160, %v457
    %v489 = vadd.f32 %v161, %v459
    %v490 = vadd.f32 %v162, %v461
    %v491 = vadd.f32 %v163, %v463
    %v492 = vadd.f32 %v166, %v464
    %v493 = vadd.f32 %v167, %v465
    %v494 = vadd.f32 %v168, %v467
    %v495 = vadd.f32 %v169, %v469
    %v496 = vadd.f32 %v170, %v471
    %v497 = vadd.f32 %v171, %v473
    %v498 = vrot.slane %v160, 2
    %v499 = vrot.slane %v161, 2
    %v500 = vrot.slane %v162, 2
    %v501 = vsel %vm257, %v498, %v500
    %v502 = vrot.slane %v163, 2
    %v503 = vsel %vm257, %v499, %v502
    %v504 = vrot.slane %v164, 2
    %v505 = vsel %vm257, %v500, %v504
    %v506 = vrot.slane %v165, 2
    %v507 = vsel %vm257, %v502, %v506
    %v508 = vrot.slane %v168, 2
    %v509 = vrot.slane %v169, 2
    %v510 = vrot.slane %v170, 2
    %v511 = vsel %vm257, %v508, %v510
    %v512 = vrot.slane %v171, 2
    %v513 = vsel %vm257, %v509, %v512
    %v514 = vrot.slane %v172, 2
    %v515 = vsel %vm257, %v510, %v514
    %v516 = vrot.slane %v173, 2
    %v517 = vsel %vm257, %v512, %v516
    %v530 = vadd.f32 %v158, %v498
    %v531 = vadd.f32 %v159, %v499
    %v532 = vadd.f32 %v160, %v501
    %v533 = vadd.f32 %v161, %v503
    %v534 = vadd.f32 %v162, %v505
    %v535 = vadd.f32 %v163, %v507
    %v536 = vadd.f32 %v166, %v508
    %v537 = vadd.f32 %v167, %v509
    %v538 = vadd.f32 %v168, %v511
    %v539 = vadd.f32 %v169, %v513
    %v540 = vadd.f32 %v170, %v515
    %v541 = vadd.f32 %v171, %v517
    %v542 = vrot.slane %v105, 4
    %v543 = vrot.slane %v107, 4
    %v544 = vsel %vm365, %v542, %v543
    %v545 = vrot.slane %v109, 4
    %v546 = vsel %vm365, %v543, %v545
    %v547 = vrot.slane %v113, 4
    %v548 = vrot.slane %v115, 4
    %v549 = vsel %vm365, %v547, %v548
    %v550 = vrot.slane %v117, 4
    %v551 = vsel %vm365, %v548, %v550
    %v558 = vadd.f32 %v103, %v542
    %v559 = vadd.f32 %v105, %v544
    %v560 = vadd.f32 %v107, %v546
    %v561 = vadd.f32 %v111, %v547
    %v562 = vadd.f32 %v113, %v549
    %v563 = vadd.f32 %v115, %v551
    %v564 = vrot.slane %v105, 2
    %v565 = vrot.slane %v107, 2
    %v566 = vsel %vm257, %v564, %v565
    %v567 = vrot.slane %v109, 2
    %v568 = vsel %vm257, %v565, %v567
    %v569 = vrot.slane %v113, 2
    %v570 = vrot.slane %v115, 2
    %v571 = vsel %vm257, %v569, %v570
    %v572 = vrot.slane %v117, 2
    %v573 = vsel %vm257, %v570, %v572
    %v580 = vadd.f32 %v103, %v564
    %v581 = vadd.f32 %v105, %v566
    %v582 = vadd.f32 %v107, %v568
    %v583 = vadd.f32 %v111, %v569
    %v584 = vadd.f32 %v113, %v571
    %v585 = vadd.f32 %v115, %v573
    %v586 = vmul.f32 %v398, -0.083333336
    %v587 = vmul.f32 %v399, -0.083333336
    %v588 = vmul.f32 %v400, -0.083333336
    %v589 = vmul.f32 %v401, -0.083333336
    %v590 = vmul.f32 %v402, -0.083333336
    %v591 = vmul.f32 %v403, -0.083333336
    %v592 = vmul.f32 %v404, -0.083333336
    %v593 = vmul.f32 %v405, -0.083333336
    %v594 = vmul.f32 %v406, -0.083333336
    %v595 = vmul.f32 %v407, -0.083333336
    %v596 = vmul.f32 %v408, -0.083333336
    %v597 = vmul.f32 %v409, -0.083333336
    %v598 = vmul.f32 %v442, 0.16666667
    %v599 = vmul.f32 %v443, 0.16666667
    %v600 = vmul.f32 %v444, 0.16666667
    %v601 = vmul.f32 %v445, 0.16666667
    %v602 = vmul.f32 %v446, 0.16666667
    %v603 = vmul.f32 %v447, 0.16666667
    %v604 = vmul.f32 %v448, 0.16666667
    %v605 = vmul.f32 %v449, 0.16666667
    %v606 = vmul.f32 %v450, 0.16666667
    %v607 = vmul.f32 %v451, 0.16666667
    %v608 = vmul.f32 %v452, 0.16666667
    %v609 = vmul.f32 %v453, 0.16666667
    %v622 = vrot.slane %v598, 1
    %v623 = vrot.slane %v600, 1
    %v624 = vsel %vm288, %v622, %v623
    %v625 = vrot.slane %v599, 1
    %v626 = vrot.slane %v601, 1
    %v627 = vsel %vm288, %v625, %v626
    %v628 = vrot.slane %v602, 1
    %v629 = vsel %vm288, %v623, %v628
    %v630 = vrot.slane %v603, 1
    %v631 = vsel %vm288, %v626, %v630
    %v632 = vrot.slane %v604, 1
    %v633 = vrot.slane %v606, 1
    %v634 = vsel %vm288, %v632, %v633
    %v635 = vrot.slane %v605, 1
    %v636 = vrot.slane %v607, 1
    %v637 = vsel %vm288, %v635, %v636
    %v638 = vrot.slane %v608, 1
    %v639 = vsel %vm288, %v633, %v638
    %v640 = vrot.slane %v609, 1
    %v641 = vsel %vm288, %v636, %v640
    %v654 = vadd.f32 %v586, %v624
    %v655 = vadd.f32 %v587, %v627
    %v656 = vadd.f32 %v588, %v629
    %v657 = vadd.f32 %v589, %v631
    %v658 = vadd.f32 %v590, %v628
    %v659 = vadd.f32 %v591, %v630
    %v660 = vadd.f32 %v592, %v634
    %v661 = vadd.f32 %v593, %v637
    %v662 = vadd.f32 %v594, %v639
    %v663 = vadd.f32 %v595, %v641
    %v664 = vadd.f32 %v596, %v638
    %v665 = vadd.f32 %v597, %v640
    %v666 = vmul.f32 %v339, -0.16666667
    %v667 = vmul.f32 %v340, -0.16666667
    %v668 = vmul.f32 %v341, -0.16666667
    %v669 = vmul.f32 %v342, -0.16666667
    %v670 = vmul.f32 %v347, -0.16666667
    %v671 = vmul.f32 %v348, -0.16666667
    %v672 = vmul.f32 %v349, -0.16666667
    %v673 = vmul.f32 %v350, -0.16666667
    %v682 = vrot.slane %v666, 2
    %v683 = vrot.slane %v667, 2
    %v684 = vrot.slane %v668, 2
    %v685 = vsel %vm257, %v682, %v684
    %v686 = vrot.slane %v669, 2
    %v687 = vsel %vm257, %v683, %v686
    %v688 = vrot.slane %v670, 2
    %v689 = vrot.slane %v671, 2
    %v690 = vrot.slane %v672, 2
    %v691 = vsel %vm257, %v688, %v690
    %v692 = vrot.slane %v673, 2
    %v693 = vsel %vm257, %v689, %v692
    %v706 = vadd.f32 %v654, %v682
    %v707 = vadd.f32 %v655, %v683
    %v708 = vadd.f32 %v656, %v685
    %v709 = vadd.f32 %v657, %v687
    %v710 = vadd.f32 %v658, %v684
    %v711 = vadd.f32 %v659, %v686
    %v712 = vadd.f32 %v660, %v688
    %v713 = vadd.f32 %v661, %v689
    %v714 = vadd.f32 %v662, %v691
    %v715 = vadd.f32 %v663, %v693
    %v716 = vadd.f32 %v664, %v690
    %v717 = vadd.f32 %v665, %v692
    %v718 = vmul.f32 %v486, 0.16666667
    %v719 = vmul.f32 %v487, 0.16666667
    %v720 = vmul.f32 %v488, 0.16666667
    %v721 = vmul.f32 %v489, 0.16666667
    %v722 = vmul.f32 %v490, 0.16666667
    %v723 = vmul.f32 %v491, 0.16666667
    %v724 = vmul.f32 %v492, 0.16666667
    %v725 = vmul.f32 %v493, 0.16666667
    %v726 = vmul.f32 %v494, 0.16666667
    %v727 = vmul.f32 %v495, 0.16666667
    %v728 = vmul.f32 %v496, 0.16666667
    %v729 = vmul.f32 %v497, 0.16666667
    %742 = vrot.lane.b32.xlu0 %v718, 127
    %v743 = vpop.permute.xlu0 %742
    %744 = vrot.lane.b32.xlu0 %v719, 127
    %v745 = vpop.permute.xlu0 %744
    %746 = vrot.lane.b32.xlu0 %v720, 127
    %v747 = vpop.permute.xlu0 %746
    %748 = vrot.lane.b32.xlu0 %v721, 127
    %v749 = vpop.permute.xlu0 %748
    %750 = vrot.lane.b32.xlu0 %v722, 127
    %v751 = vpop.permute.xlu0 %750
    %752 = vrot.lane.b32.xlu0 %v723, 127
    %v753 = vpop.permute.xlu0 %752
    %754 = vrot.lane.b32.xlu0 %v724, 127
    %v755 = vpop.permute.xlu0 %754
    %756 = vrot.lane.b32.xlu0 %v725, 127
    %v757 = vpop.permute.xlu0 %756
    %758 = vrot.lane.b32.xlu0 %v726, 127
    %v759 = vpop.permute.xlu0 %758
    %760 = vrot.lane.b32.xlu0 %v727, 127
    %v761 = vpop.permute.xlu0 %760
    %762 = vrot.lane.b32.xlu0 %v728, 127
    %v763 = vpop.permute.xlu0 %762
    %764 = vrot.lane.b32.xlu0 %v729, 127
    %v765 = vpop.permute.xlu0 %764
    %vm766 = vcmask 1039360
    %v767 = vsel %vm766, %v743, %v745
    %v768 = vsel %vm766, %v747, %v749
    %v769 = vsel %vm766, %v751, %v753
    %v770 = vsel %vm766, %v755, %v757
    %v771 = vsel %vm766, %v759, %v761
    %v772 = vsel %vm766, %v763, %v765
    %v785 = vadd.f32 %v706, %v767
    %v786 = vadd.f32 %v707, %v745
    %v787 = vadd.f32 %v708, %v768
    %v788 = vadd.f32 %v709, %v749
    %v789 = vadd.f32 %v710, %v769
    %v790 = vadd.f32 %v711, %v753
    %v791 = vadd.f32 %v712, %v770
    %v792 = vadd.f32 %v713, %v757
    %v793 = vadd.f32 %v714, %v771
    %v794 = vadd.f32 %v715, %v761
    %v795 = vadd.f32 %v716, %v772
    %v796 = vadd.f32 %v717, %v765
    %v797 = vmul.f32 %v530, -0.5
    %v798 = vmul.f32 %v531, -0.5
    %v799 = vmul.f32 %v532, -0.5
    %v800 = vmul.f32 %v533, -0.5
    %v801 = vmul.f32 %v534, -0.5
    %v802 = vmul.f32 %v535, -0.5
    %v803 = vmul.f32 %v536, -0.5
    %v804 = vmul.f32 %v537, -0.5
    %v805 = vmul.f32 %v538, -0.5
    %v806 = vmul.f32 %v539, -0.5
    %v807 = vmul.f32 %v540, -0.5
    %v808 = vmul.f32 %v541, -0.5
    %v821 = vrot.slane %v797, 1
    %v822 = vrot.slane %v799, 1
    %v823 = vsel %vm288, %v821, %v822
    %v824 = vrot.slane %v798, 1
    %v825 = vrot.slane %v800, 1
    %v826 = vsel %vm288, %v824, %v825
    %v827 = vrot.slane %v801, 1
    %v828 = vsel %vm288, %v822, %v827
    %v829 = vrot.slane %v802, 1
    %v830 = vsel %vm288, %v825, %v829
    %v831 = vrot.slane %v803, 1
    %v832 = vrot.slane %v805, 1
    %v833 = vsel %vm288, %v831, %v832
    %v834 = vrot.slane %v804, 1
    %v835 = vrot.slane %v806, 1
    %v836 = vsel %vm288, %v834, %v835
    %v837 = vrot.slane %v807, 1
    %v838 = vsel %vm288, %v832, %v837
    %v839 = vrot.slane %v808, 1
    %v840 = vsel %vm288, %v835, %v839
    %841 = vrot.lane.b32.xlu0 %v823, 127
    %v842 = vpop.permute.xlu0 %841
    %843 = vrot.lane.b32.xlu0 %v826, 127
    %v844 = vpop.permute.xlu0 %843
    %845 = vrot.lane.b32.xlu0 %v828, 127
    %v846 = vpop.permute.xlu0 %845
    %847 = vrot.lane.b32.xlu0 %v830, 127
    %v848 = vpop.permute.xlu0 %847
    %849 = vrot.lane.b32.xlu0 %v827, 127
    %v850 = vpop.permute.xlu0 %849
    %851 = vrot.lane.b32.xlu0 %v829, 127
    %v852 = vpop.permute.xlu0 %851
    %853 = vrot.lane.b32.xlu0 %v833, 127
    %v854 = vpop.permute.xlu0 %853
    %855 = vrot.lane.b32.xlu0 %v836, 127
    %v856 = vpop.permute.xlu0 %855
    %857 = vrot.lane.b32.xlu0 %v838, 127
    %v858 = vpop.permute.xlu0 %857
    %859 = vrot.lane.b32.xlu0 %v840, 127
    %v860 = vpop.permute.xlu0 %859
    %861 = vrot.lane.b32.xlu0 %v837, 127
    %v862 = vpop.permute.xlu0 %861
    %863 = vrot.lane.b32.xlu0 %v839, 127
    %v864 = vpop.permute.xlu0 %863
    %v865 = vsel %vm766, %v842, %v844
    %v866 = vsel %vm766, %v846, %v848
    %v867 = vsel %vm766, %v850, %v852
    %v868 = vsel %vm766, %v854, %v856
    %v869 = vsel %vm766, %v858, %v860
    %v870 = vsel %vm766, %v862, %v864
    %v883 = vadd.f32 %v785, %v865
    %v884 = vadd.f32 %v786, %v844
    %v885 = vadd.f32 %v787, %v866
    %v886 = vadd.f32 %v788, %v848
    %v887 = vadd.f32 %v789, %v867
    %v888 = vadd.f32 %v790, %v852
    %v889 = vadd.f32 %v791, %v868
    %v890 = vadd.f32 %v792, %v856
    %v891 = vadd.f32 %v793, %v869
    %v892 = vadd.f32 %v794, %v860
    %v893 = vadd.f32 %v795, %v870
    %v894 = vadd.f32 %v796, %v864
    %v895 = vmul.f32 %v160, 0.6666667
    %v896 = vmul.f32 %v161, 0.6666667
    %v897 = vmul.f32 %v162, 0.6666667
    %v898 = vmul.f32 %v163, 0.6666667
    %v899 = vmul.f32 %v168, 0.6666667
    %v900 = vmul.f32 %v169, 0.6666667
    %v901 = vmul.f32 %v170, 0.6666667
    %v902 = vmul.f32 %v171, 0.6666667
    %v911 = vrot.slane %v895, 2
    %v912 = vrot.slane %v896, 2
    %v913 = vrot.slane %v897, 2
    %v914 = vsel %vm257, %v911, %v913
    %v915 = vrot.slane %v898, 2
    %v916 = vsel %vm257, %v912, %v915
    %v917 = vrot.slane %v899, 2
    %v918 = vrot.slane %v900, 2
    %v919 = vrot.slane %v901, 2
    %v920 = vsel %vm257, %v917, %v919
    %v921 = vrot.slane %v902, 2
    %v922 = vsel %vm257, %v918, %v921
    %923 = vrot.lane.b32.xlu0 %v911, 127
    %v924 = vpop.permute.xlu0 %923
    %925 = vrot.lane.b32.xlu0 %v912, 127
    %v926 = vpop.permute.xlu0 %925
    %927 = vrot.lane.b32.xlu0 %v914, 127
    %v928 = vpop.permute.xlu0 %927
    %929 = vrot.lane.b32.xlu0 %v916, 127
    %v930 = vpop.permute.xlu0 %929
    %931 = vrot.lane.b32.xlu0 %v913, 127
    %v932 = vpop.permute.xlu0 %931
    %933 = vrot.lane.b32.xlu0 %v915, 127
    %v934 = vpop.permute.xlu0 %933
    %935 = vrot.lane.b32.xlu0 %v917, 127
    %v936 = vpop.permute.xlu0 %935
    %937 = vrot.lane.b32.xlu0 %v918, 127
    %v938 = vpop.permute.xlu0 %937
    %939 = vrot.lane.b32.xlu0 %v920, 127
    %v940 = vpop.permute.xlu0 %939
    %941 = vrot.lane.b32.xlu0 %v922, 127
    %v942 = vpop.permute.xlu0 %941
    %943 = vrot.lane.b32.xlu0 %v919, 127
    %v944 = vpop.permute.xlu0 %943
    %945 = vrot.lane.b32.xlu0 %v921, 127
    %v946 = vpop.permute.xlu0 %945
    %v947 = vsel %vm766, %v924, %v926
    %v948 = vsel %vm766, %v928, %v930
    %v949 = vsel %vm766, %v932, %v934
    %v950 = vsel %vm766, %v936, %v938
    %v951 = vsel %vm766, %v940, %v942
    %v952 = vsel %vm766, %v944, %v946
    %v965 = vadd.f32 %v883, %v947
    %v966 = vadd.f32 %v884, %v926
    %v967 = vadd.f32 %v885, %v948
    %v968 = vadd.f32 %v886, %v930
    %v969 = vadd.f32 %v887, %v949
    %v970 = vadd.f32 %v888, %v934
    %v971 = vadd.f32 %v889, %v950
    %v972 = vadd.f32 %v890, %v938
    %v973 = vadd.f32 %v891, %v951
    %v974 = vadd.f32 %v892, %v942
    %v975 = vadd.f32 %v893, %v952
    %v976 = vadd.f32 %v894, %v946
    %v977 = vmul.f32 %v558, -0.16666667
    %v978 = vmul.f32 %v559, -0.16666667
    %v979 = vmul.f32 %v560, -0.16666667
    %v980 = vmul.f32 %v561, -0.16666667
    %v981 = vmul.f32 %v562, -0.16666667
    %v982 = vmul.f32 %v563, -0.16666667
    %989 = vrot.lane.b32.xlu0 %v977, 126
    %v990 = vpop.permute.xlu0 %989
    %991 = vrot.lane.b32.xlu0 %v978, 126
    %v992 = vpop.permute.xlu0 %991
    %993 = vrot.lane.b32.xlu0 %v979, 126
    %v994 = vpop.permute.xlu0 %993
    %995 = vrot.lane.b32.xlu0 %v980, 126
    %v996 = vpop.permute.xlu0 %995
    %997 = vrot.lane.b32.xlu0 %v981, 126
    %v998 = vpop.permute.xlu0 %997
    %999 = vrot.lane.b32.xlu0 %v982, 126
    %v1000 = vpop.permute.xlu0 %999
    %v1007 = vadd.f32 %v965, %v990
    %v1008 = vadd.f32 %v966, %v990
    %v1009 = vadd.f32 %v967, %v992
    %v1010 = vadd.f32 %v968, %v992
    %v1011 = vadd.f32 %v969, %v994
    %v1012 = vadd.f32 %v970, %v994
    %v1013 = vadd.f32 %v971, %v996
    %v1014 = vadd.f32 %v972, %v996
    %v1015 = vadd.f32 %v973, %v998
    %v1016 = vadd.f32 %v974, %v998
    %v1017 = vadd.f32 %v975, %v1000
    %v1018 = vadd.f32 %v976, %v1000
    %v1019 = vmul.f32 %v580, 0.6666667
    %v1020 = vmul.f32 %v581, 0.6666667
    %v1021 = vmul.f32 %v582, 0.6666667
    %v1022 = vmul.f32 %v583, 0.6666667
    %v1023 = vmul.f32 %v584, 0.6666667
    %v1024 = vmul.f32 %v585, 0.6666667
    %v1031 = vrot.slane %v1019, 1
    %v1032 = vrot.slane %v1020, 1
    %v1033 = vsel %vm288, %v1031, %v1032
    %v1034 = vrot.slane %v1021, 1
    %v1035 = vsel %vm288, %v1032, %v1034
    %v1036 = vrot.slane %v1022, 1
    %v1037 = vrot.slane %v1023, 1
    %v1038 = vsel %vm288, %v1036, %v1037
    %v1039 = vrot.slane %v1024, 1
    %v1040 = vsel %vm288, %v1037, %v1039
    %1041 = vrot.lane.b32.xlu0 %v1033, 126
    %v1042 = vpop.permute.xlu0 %1041
    %1043 = vrot.lane.b32.xlu0 %v1035, 126
    %v1044 = vpop.permute.xlu0 %1043
    %1045 = vrot.lane.b32.xlu0 %v1034, 126
    %v1046 = vpop.permute.xlu0 %1045
    %1047 = vrot.lane.b32.xlu0 %v1038, 126
    %v1048 = vpop.permute.xlu0 %1047
    %1049 = vrot.lane.b32.xlu0 %v1040, 126
    %v1050 = vpop.permute.xlu0 %1049
    %1051 = vrot.lane.b32.xlu0 %v1039, 126
    %v1052 = vpop.permute.xlu0 %1051
    %v1059 = vadd.f32 %v1007, %v1042
    %v1060 = vadd.f32 %v1008, %v1042
    %v1061 = vadd.f32 %v1009, %v1044
    %v1062 = vadd.f32 %v1010, %v1044
    %v1063 = vadd.f32 %v1011, %v1046
    %v1064 = vadd.f32 %v1012, %v1046
    %v1065 = vadd.f32 %v1013, %v1048
    %v1066 = vadd.f32 %v1014, %v1048
    %v1067 = vadd.f32 %v1015, %v1050
    %v1068 = vadd.f32 %v1016, %v1050
    %v1069 = vadd.f32 %v1017, %v1052
    %v1070 = vadd.f32 %v1018, %v1052
    %v1071 = vmul.f32 %v105, -1.0
    %v1072 = vmul.f32 %v107, -1.0
    %v1073 = vmul.f32 %v113, -1.0
    %v1074 = vmul.f32 %v115, -1.0
    %v1079 = vrot.slane %v1071, 2
    %v1080 = vrot.slane %v1072, 2
    %v1081 = vsel %vm257, %v1079, %v1080
    %v1082 = vrot.slane %v1073, 2
    %v1083 = vrot.slane %v1074, 2
    %v1084 = vsel %vm257, %v1082, %v1083
    %1085 = vrot.lane.b32.xlu0 %v1079, 126
    %v1086 = vpop.permute.xlu0 %1085
    %1087 = vrot.lane.b32.xlu0 %v1081, 126
    %v1088 = vpop.permute.xlu0 %1087
    %1089 = vrot.lane.b32.xlu0 %v1080, 126
    %v1090 = vpop.permute.xlu0 %1089
    %1091 = vrot.lane.b32.xlu0 %v1082, 126
    %v1092 = vpop.permute.xlu0 %1091
    %1093 = vrot.lane.b32.xlu0 %v1084, 126
    %v1094 = vpop.permute.xlu0 %1093
    %1095 = vrot.lane.b32.xlu0 %v1083, 126
    %v1096 = vpop.permute.xlu0 %1095
    %v1103 = vadd.f32 %v1059, %v1086
    %v1104 = vadd.f32 %v1060, %v1086
    %v1105 = vadd.f32 %v1061, %v1088
    %v1106 = vadd.f32 %v1062, %v1088
    %v1107 = vadd.f32 %v1063, %v1090
    %v1108 = vadd.f32 %v1064, %v1090
    %v1109 = vadd.f32 %v1065, %v1092
    %v1110 = vadd.f32 %v1066, %v1092
    %v1111 = vadd.f32 %v1067, %v1094
    %v1112 = vadd.f32 %v1068, %v1094
    %v1113 = vadd.f32 %v1069, %v1096
    %v1114 = vadd.f32 %v1070, %v1096
    %s1115 = scalar_lea.vmem [#allocation6], 48
    %1116 = vst.msk [vmem:[%s1115] sm:$0xff] %vm35, %v247
    %1117 = vst.msk [vmem:[%s1115 + $0x8] sm:$0xff] %vm35, %v248
    %1118 = vst.msk [vmem:[%s1115 + $0x60] sm:$0xff] %vm35, %v249
    %1119 = vst.msk [vmem:[%s1115 + $0x68] sm:$0xff] %vm35, %v250
    %s1120 = scalar_lea.vmem [#allocation6], 64
    %vm1121 = vcmask 130055
    %1122 = vst.msk [vmem:[%s1120 - $0x7] sm:$0x80] %vm1121, %v307
    %1123 = vst.msk [vmem:[%s1120 + $0x1] sm:$0xff] %vm35, %v308
    %vm1124 = vcmask 129024
    %1125 = vst.msk [vmem:[%s1120 + $0x9] sm:$0x7f] %vm1124, %v309
    %1126 = vst.msk [vmem:[%s1120 + $0x59] sm:$0x80] %vm1121, %v310
    %1127 = vst.msk [vmem:[%s1120 + $0x61] sm:$0xff] %vm35, %v311
    %1128 = vst.msk [vmem:[%s1120 + $0x69] sm:$0x7f] %vm1124, %v312
    %1141 = vrot.lane.b32.xlu0 %v1103, 2
    %v1142 = vpop.permute.xlu0 %1141
    %1143 = vrot.lane.b32.xlu0 %v1104, 2
    %v1144 = vpop.permute.xlu0 %1143
    %1145 = vrot.lane.b32.xlu0 %v1105, 2
    %v1146 = vpop.permute.xlu0 %1145
    %1147 = vrot.lane.b32.xlu0 %v1106, 2
    %v1148 = vpop.permute.xlu0 %1147
    %1149 = vrot.lane.b32.xlu0 %v1107, 2
    %v1150 = vpop.permute.xlu0 %1149
    %1151 = vrot.lane.b32.xlu0 %v1108, 2
    %v1152 = vpop.permute.xlu0 %1151
    %1153 = vrot.lane.b32.xlu0 %v1109, 2
    %v1154 = vpop.permute.xlu0 %1153
    %1155 = vrot.lane.b32.xlu0 %v1110, 2
    %v1156 = vpop.permute.xlu0 %1155
    %1157 = vrot.lane.b32.xlu0 %v1111, 2
    %v1158 = vpop.permute.xlu0 %1157
    %1159 = vrot.lane.b32.xlu0 %v1112, 2
    %v1160 = vpop.permute.xlu0 %1159
    %1161 = vrot.lane.b32.xlu0 %v1113, 2
    %v1162 = vpop.permute.xlu0 %1161
    %1163 = vrot.lane.b32.xlu0 %v1114, 2
    %v1164 = vpop.permute.xlu0 %1163
    %vm1165 = vcmask 15360
    %v1166 = vsel %vm1165, %v1142, %v1144
    %v1167 = vsel %vm1165, %v1146, %v1148
    %v1168 = vsel %vm1165, %v1150, %v1152
    %v1169 = vsel %vm1165, %v1154, %v1156
    %v1170 = vsel %vm1165, %v1158, %v1160
    %v1171 = vsel %vm1165, %v1162, %v1164
    %s1178 = scalar_lea.vmem [#allocation6], 80
    %vm1179 = vcmask 130054
    %1180 = vst.msk [vmem:[%s1178 - $0x6] sm:$0xc0] %vm1179, %v1166
    %1181 = vst.msk [vmem:[%s1178 + $0x2] sm:$0xff] %vm35, %v1167
    %vm1182 = vcmask 128000
    %1183 = vst.msk [vmem:[%s1178 + $0xa] sm:$0x3f] %vm1182, %v1168
    %1184 = vst.msk [vmem:[%s1178 + $0x5a] sm:$0xc0] %vm1179, %v1169
    %1185 = vst.msk [vmem:[%s1178 + $0x62] sm:$0xff] %vm35, %v1170
    %1186 = vst.msk [vmem:[%s1178 + $0x6a] sm:$0x3f] %vm1182, %v1171
    // Predicated region
    $region10: #{srm_wrapper_forward.1} parent=1 // pred_check
      _
    $region11: #{srm_wrapper_forward.1} parent=1 // pred_check_branch
      %1188 = sbr.rel (0) target = $region13
    $region12: #{srm_wrapper_forward.1} parent=1 // pred_region
      %s1190 = ssub.s32 3072, 3072
      %1191 = vsyncadd [#allocation5], %s1190
      %s1192 = sshll.u32 [#allocation6], 4
      %s1193 = int_to_ptr.vmem [resolvable:$true] %s1192
      %1198 = dma.vmem_to_hbm [thread:$0]  %s1193, 3072, %s1, [#allocation5], 128, 128, 8
    $region13: #{srm_wrapper_forward.1} parent=1 // pred_fallthru
      _
    // Predicated region
    $region14: #{srm_wrapper_forward.1} parent=1 // pred_check
      _
    $region15: #{srm_wrapper_forward.1} parent=1 // pred_check_branch
      %1200 = sbr.rel (0) target = $region17
    $region16: #{srm_wrapper_forward.1} parent=1 // pred_region
      %1201 = dma.done [#allocation5], 3072
    $region17: #{srm_wrapper_forward.1} parent=1 // pred_fallthru
      _
    %1202 = vsyncpa [#allocation4], 1
    %1203 = vsyncpa [#allocation5], 1

</llo_original>
